<compile_context>
chip_gen: v5e
topology: v5e:2x2
jax: 0.10.0
libtpu: 0.0.40
codegen_flags: <defaults>
</compile_context>

<pallas_src>
import math

import jax
import jax.numpy as jnp
from jax.experimental import pallas as pl
from jax.experimental.pallas import tpu as pltpu

# ----------------------------- configuration --------------------------------
INPUT_DIM = 16
HIDDEN_DIM = 32
NUM_LAYERS = 2
CONDITION_DIM = 8
STATE_DIM = 16
EXPAND = 2
INTER_DIM = HIDDEN_DIM * EXPAND              # 64
DT_RANK = INTER_DIM                          # required for dt + dt_bias broadcast
DBC_DIM = DT_RANK + 2 * STATE_DIM            # fused dt/B/C projection width (96)
EPS = 1e-5

PROJ_IN = INPUT_DIM + HIDDEN_DIM + CONDITION_DIM            # 56  (x | sin | cond)
PROJ_OUT = HIDDEN_DIM + 4 * HIDDEN_DIM + HIDDEN_DIM         # 192 (h | te1 | ce1)
MLP2_IN = 4 * HIDDEN_DIM + HIDDEN_DIM                       # 160 (te1 | ce1)
SLAB_COLS = PROJ_OUT                                        # 192 lanes per slab row


# ----------------------------- packed-slab layouts ---------------------------
def _round8(n):
    return -(-n // 8) * 8


def _build_layouts():
    # Matrix slab: each matrix occupies [row0:row0+rows, 0:cols]; row0 is
    # 8-sublane aligned, column offset is always 0 (lane-aligned).
    w_layout, row = {}, 0

    def add_w(name, nrows, ncols):
        nonlocal row
        w_layout[name] = (row, nrows, ncols)
        row += _round8(nrows)

    add_w("w1", PROJ_IN, PROJ_OUT)                 # block-diag prologue [56,192]
    add_w("w2", MLP2_IN, HIDDEN_DIM)               # fused MLP stage 2   [160,32]
    add_w("condw", HIDDEN_DIM, NUM_LAYERS * INTER_DIM)   # hoisted cond  [32,128]
    for l in range(NUM_LAYERS):
        add_w(f"inw{l}", HIDDEN_DIM, 2 * INTER_DIM)      # [32,128]
        add_w(f"dbcw{l}", INTER_DIM, DBC_DIM)            # [64,96]
        add_w(f"outw{l}", INTER_DIM, HIDDEN_DIM)         # [64,32]
    add_w("headw", HIDDEN_DIM, INPUT_DIM)                # [32,16]
    w_rows = row

    # Vector slab: one row per vector (biases / LN / conv / dt_bias / D).
    v_layout, vrow = {}, 0

    def add_v(name, ncols):
        nonlocal vrow
        v_layout[name] = (vrow, ncols)
        vrow += 1

    add_v("b1", PROJ_OUT)
    add_v("b2", HIDDEN_DIM)
    add_v("condb", NUM_LAYERS * INTER_DIM)
    add_v("onorm_w", HIDDEN_DIM)
    add_v("onorm_b", HIDDEN_DIM)
    add_v("head_b", INPUT_DIM)
    for l in range(NUM_LAYERS):
        add_v(f"ln_w{l}", HIDDEN_DIM)
        add_v(f"ln_b{l}", HIDDEN_DIM)
        add_v(f"in_b{l}", 2 * INTER_DIM)
        add_v(f"conv_w{l}", INTER_DIM)
        add_v(f"conv_b{l}", INTER_DIM)
        add_v(f"dbc_b{l}", DBC_DIM)
        add_v(f"dt_bias{l}", INTER_DIM)
        add_v(f"d{l}", INTER_DIM)
        add_v(f"out_b{l}", HIDDEN_DIM)
    v_rows = _round8(vrow)
    return w_layout, w_rows, v_layout, v_rows


W_LAYOUT, W_ROWS, V_LAYOUT, V_ROWS = _build_layouts()


# ----------------------------- small math helpers ---------------------------
def _sigmoid(x):
    # One EUP tanh instead of exp + full-precision divide; no overflow.
    return 0.5 * (jnp.tanh(0.5 * x) + 1.0)


def _silu(x):
    return x * _sigmoid(x)


def _softplus(x):
    return jnp.maximum(x, 0.0) + jnp.log1p(jnp.exp(-jnp.abs(x)))


def _layernorm(x, w, b):
    mu = jnp.mean(x, axis=-1, keepdims=True)
    var = jnp.mean(jnp.square(x - mu), axis=-1, keepdims=True)
    return (x - mu) * jax.lax.rsqrt(var + EPS) * w + b


def _dot(a, b):
    return jnp.dot(a, b, preferred_element_type=jnp.float32)


# ----------------------------- fused Pallas kernel ---------------------------
def fused_forward_kernel(xin_ref, w_ref, v_ref, o_ref):
    def w(name):                       # static matrix slice from the packed slab
        r0, nr, nc = W_LAYOUT[name]
        return w_ref[r0:r0 + nr, :nc]

    def v(name):                       # static (1, nc) vector slice -> broadcasts
        r0, nc = V_LAYOUT[name]
        return v_ref[r0:r0 + 1, :nc]

    xin = xin_ref[...]                                               # [B, 56]

    # ---- fused prologue: input embedding + both MLP first stages ------------
    p1 = _dot(xin, w("w1")) + v("b1")                                # [B, 192]
    h = p1[:, :HIDDEN_DIM]                                           # [B, 32]
    a1 = _silu(p1[:, HIDDEN_DIM:])                                   # [B, 160]
    emb = _dot(a1, w("w2")) + v("b2")                                # [B, 32]

    # ---- layer-invariant condition projections, hoisted out of the loop ------
    cond_all = _dot(emb, w("condw")) + v("condb")                    # [B, 128]

    # ---- NUM_LAYERS Mamba blocks (statically unrolled) -----------------------
    for l in range(NUM_LAYERS):
        residual = h
        xn = _layernorm(h, v(f"ln_w{l}"), v(f"ln_b{l}"))

        # fused input projection (lane-dense 128-wide result), static lane
        # slices for xp / gate.
        proj = _dot(xn, w(f"inw{l}")) + v(f"in_b{l}")                # [B, 128]
        xp = proj[:, :INTER_DIM]
        gate = proj[:, INTER_DIM:]

        # depthwise Conv1d(k=3, pad=1) over a length-1 sequence: only the
        # center tap + bias contribute (exact for L == 1).
        xp = _silu(xp * v(f"conv_w{l}") + v(f"conv_b{l}"))

        # hoisted condition projection for this layer (static 64-lane slice).
        xp = xp + cond_all[:, l * INTER_DIM:(l + 1) * INTER_DIM]

        # fused dt / B / C projection, static lane slices.
        dbc = _dot(xp, w(f"dbcw{l}")) + v(f"dbc_b{l}")               # [B, 96]
        dt = _softplus(dbc[:, :DT_RANK] + v(f"dt_bias{l}"))          # [B, 64]
        Bm = dbc[:, DT_RANK:DT_RANK + STATE_DIM]                     # [B, 16]
        Cm = dbc[:, DT_RANK + STATE_DIM:DBC_DIM]                     # [B, 16]

        # selective scan, L == 1, h0 == 0 (exp(A*dt)*h0 term vanishes).
        dt_mean = jnp.mean(dt, axis=-1, keepdims=True)               # [B, 1]
        x_mean = jnp.mean(xp, axis=-1, keepdims=True)                # [B, 1]
        hstate = (Bm * dt_mean) * x_mean                             # [B, 16]
        y = jnp.sum(Cm * hstate, axis=-1, keepdims=True) + xp * v(f"d{l}")

        # gating + output projection (dropout = eval-mode identity).
        y = y * _silu(gate)
        y = _dot(y, w(f"outw{l}")) + v(f"out_b{l}")                  # [B, 32]
        h = residual + y

    # ---- output LayerNorm + head --------------------------------------------
    hn = _layernorm(h, v("onorm_w"), v("onorm_b"))
    o_ref[...] = _dot(hn, w("headw")) + v("head_b")                  # [B, 16]


# ----------------------------- forward (Pallas) -------------------------------
def forward(packed, x, timestep, condition):
    """Fused forward.  `packed` comes from pack_params()."""
    B = x.shape[0]

    # Sinusoidal timestep features: tiny [B, H] tensor computed in the XLA
    # prologue, concatenated with x and condition into ONE [B,56] activation DMA.
    args = timestep.astype(jnp.float32)[:, None] * packed["freqs"][None, :]
    sin_emb = jnp.concatenate([jnp.cos(args), jnp.sin(args)], axis=-1)   # [B, 32]
    xin = jnp.concatenate([x, sin_emb, condition], axis=-1)              # [B, 56]

    # NOTE (deployment scale): for large batches, add a batch grid here —
    # block rows a multiple of 8 (1024-2048), weights/vectors on constant
    # index_maps, dimension_semantics=("parallel",) so v7x's two TensorCores
    # split the batch; size the tile against 64 MiB VMEM on v7x (128 MiB on
    # v5e/v6e), cast matmul operands to bf16, and write a lane-dense (128-wide)
    # output block.  At B=2 a grid is pure overhead, so the call is grid-less.
    return pl.pallas_call(
        fused_forward_kernel,
        out_shape=jax.ShapeDtypeStruct((B, INPUT_DIM), jnp.float32),
        in_specs=[pl.BlockSpec(memory_space=pltpu.MemorySpace.VMEM)] * 3,
        out_specs=pl.BlockSpec(memory_space=pltpu.MemorySpace.VMEM),
    )(xin, packed["w_slab"], packed["v_slab"])


# ----------------------------- parameter init --------------------------------
def init_params(key):
    keys = iter(jax.random.split(key, 64))

    def nxt():
        return next(keys)

    def xavier(fan_in, fan_out):
        lim = math.sqrt(6.0 / (fan_in + fan_out))
        return jax.random.uniform(nxt(), (fan_in, fan_out), jnp.float32, -lim, lim)

    def zeros(n):
        return jnp.zeros((1, n), jnp.float32)

    def ones(n):
        return jnp.ones((1, n), jnp.float32)

    p = {}
    p["in_emb_w"] = xavier(INPUT_DIM, HIDDEN_DIM)
    p["in_emb_b"] = zeros(HIDDEN_DIM)

    half = HIDDEN_DIM // 2
    p["freqs"] = jnp.exp(
        -math.log(10000.0) * jnp.arange(half, dtype=jnp.float32) / half)

    p["time_w1"] = xavier(HIDDEN_DIM, HIDDEN_DIM * 4)
    p["time_b1"] = zeros(HIDDEN_DIM * 4)
    p["time_w2"] = xavier(HIDDEN_DIM * 4, HIDDEN_DIM)
    p["time_b2"] = zeros(HIDDEN_DIM)

    p["cond_w1"] = xavier(CONDITION_DIM, HIDDEN_DIM)
    p["cond_b1"] = zeros(HIDDEN_DIM)
    p["cond_w2"] = xavier(HIDDEN_DIM, HIDDEN_DIM)
    p["cond_b2"] = zeros(HIDDEN_DIM)

    conv_bound = 1.0 / math.sqrt(3.0)  # Conv1d default init, fan_in = 1 * kernel_size
    blocks = []
    for _ in range(NUM_LAYERS):
        # fused dt/B/C weight: each sub-projection keeps its own xavier fan-in/out.
        dt_w = xavier(INTER_DIM, DT_RANK)
        bp_w = xavier(INTER_DIM, STATE_DIM)
        cp_w = xavier(INTER_DIM, STATE_DIM)
        blk = {
            "ln_w": ones(HIDDEN_DIM), "ln_b": zeros(HIDDEN_DIM),
            "in_w": xavier(HIDDEN_DIM, 2 * INTER_DIM),       # fused input projection
            "in_b": zeros(2 * INTER_DIM),
            "conv_w": jax.random.uniform(nxt(), (1, INTER_DIM), jnp.float32,
                                         -conv_bound, conv_bound),
            "conv_b": jax.random.uniform(nxt(), (1, INTER_DIM), jnp.float32,
                                         -conv_bound, conv_bound),
            "cond_w": xavier(HIDDEN_DIM, INTER_DIM), "cond_b": zeros(INTER_DIM),
            "dbc_w": jnp.concatenate([dt_w, bp_w, cp_w], axis=1),
            "dbc_b": zeros(DBC_DIM),
            "dt_bias": jax.random.uniform(nxt(), (1, INTER_DIM), jnp.float32),
            "a_log": jnp.log(jnp.arange(1, STATE_DIM + 1, dtype=jnp.float32)
                             ).reshape(1, STATE_DIM),
            "d": ones(INTER_DIM),
            "out_w": xavier(INTER_DIM, HIDDEN_DIM), "out_b": zeros(HIDDEN_DIM),
        }
        blocks.append(blk)

    # stack per-layer parameters along a leading NUM_LAYERS axis
    for name in blocks[0]:
        p["blk_" + name] = jnp.stack([blk[name] for blk in blocks], axis=0)

    p["out_norm_w"] = ones(HIDDEN_DIM)
    p["out_norm_b"] = zeros(HIDDEN_DIM)
    p["out_w"] = xavier(HIDDEN_DIM, INPUT_DIM)
    p["out_b"] = zeros(INPUT_DIM)
    return p


def pack_params(p):
    """Pack all weights/biases into the two contiguous f32 slabs (done once)."""
    w_slab = jnp.zeros((W_ROWS, SLAB_COLS), jnp.float32)
    v_slab = jnp.zeros((V_ROWS, SLAB_COLS), jnp.float32)

    def put_w(slab, name, mat):
        r0, nr, nc = W_LAYOUT[name]
        assert mat.shape == (nr, nc), (name, mat.shape, (nr, nc))
        return slab.at[r0:r0 + nr, :nc].set(mat)

    def put_v(slab, name, vec):
        r0, nc = V_LAYOUT[name]
        vec = vec.reshape(1, -1)
        assert vec.shape == (1, nc), (name, vec.shape, (1, nc))
        return slab.at[r0:r0 + 1, :nc].set(vec)

    # block-diagonal prologue weight: [x | sin | cond] -> [h | te1 | ce1]
    w1 = jnp.zeros((PROJ_IN, PROJ_OUT), jnp.float32)
    w1 = w1.at[:INPUT_DIM, :HIDDEN_DIM].set(p["in_emb_w"])
    w1 = w1.at[INPUT_DIM:INPUT_DIM + HIDDEN_DIM,
               HIDDEN_DIM:HIDDEN_DIM + 4 * HIDDEN_DIM].set(p["time_w1"])
    w1 = w1.at[INPUT_DIM + HIDDEN_DIM:,
               HIDDEN_DIM + 4 * HIDDEN_DIM:].set(p["cond_w1"])
    w_slab = put_w(w_slab, "w1", w1)
    w_slab = put_w(w_slab, "w2",
                   jnp.concatenate([p["time_w2"], p["cond_w2"]], axis=0))
    w_slab = put_w(w_slab, "condw",
                   jnp.concatenate([p["blk_cond_w"][l] for l in range(NUM_LAYERS)],
                                   axis=1))
    for l in range(NUM_LAYERS):
        w_slab = put_w(w_slab, f"inw{l}", p["blk_in_w"][l])
        w_slab = put_w(w_slab, f"dbcw{l}", p["blk_dbc_w"][l])
        w_slab = put_w(w_slab, f"outw{l}", p["blk_out_w"][l])
    w_slab = put_w(w_slab, "headw", p["out_w"])

    v_slab = put_v(v_slab, "b1",
                   jnp.concatenate([p["in_emb_b"], p["time_b1"], p["cond_b1"]],
                                   axis=1))
    v_slab = put_v(v_slab, "b2", p["time_b2"] + p["cond_b2"])
    v_slab = put_v(v_slab, "condb",
                   jnp.concatenate([p["blk_cond_b"][l] for l in range(NUM_LAYERS)],
                                   axis=1))
    v_slab = put_v(v_slab, "onorm_w", p["out_norm_w"])
    v_slab = put_v(v_slab, "onorm_b", p["out_norm_b"])
    v_slab = put_v(v_slab, "head_b", p["out_b"])
    for l in range(NUM_LAYERS):
        v_slab = put_v(v_slab, f"ln_w{l}", p["blk_ln_w"][l])
        v_slab = put_v(v_slab, f"ln_b{l}", p["blk_ln_b"][l])
        v_slab = put_v(v_slab, f"in_b{l}", p["blk_in_b"][l])
        v_slab = put_v(v_slab, f"conv_w{l}", p["blk_conv_w"][l])
        v_slab = put_v(v_slab, f"conv_b{l}", p["blk_conv_b"][l])
        v_slab = put_v(v_slab, f"dbc_b{l}", p["blk_dbc_b"][l])
        v_slab = put_v(v_slab, f"dt_bias{l}", p["blk_dt_bias"][l])
        v_slab = put_v(v_slab, f"d{l}", p["blk_d"][l])
        v_slab = put_v(v_slab, f"out_b{l}", p["blk_out_b"][l])

    return {"w_slab": w_slab, "v_slab": v_slab, "freqs": p["freqs"]}


# ----------------------------- pure-JAX reference ----------------------------
def reference_forward(params, x, timestep, condition):
    dot = lambda a, b: jnp.dot(a, b, precision=jax.lax.Precision.HIGHEST)
    silu = jax.nn.silu
    B = x.shape[0]

    h = dot(x, params["in_emb_w"]) + params["in_emb_b"]
    args = timestep.astype(jnp.float32)[:, None] * params["freqs"][None, :]
    sin_emb = jnp.concatenate([jnp.cos(args), jnp.sin(args)], axis=-1)

    te = (dot(silu(dot(sin_emb, params["time_w1"]) + params["time_b1"]),
              params["time_w2"]) + params["time_b2"])
    ce = (dot(silu(dot(condition, params["cond_w1"]) + params["cond_b1"]),
              params["cond_w2"]) + params["cond_b2"])
    emb = te + ce

    for l in range(NUM_LAYERS):
        res = h
        xn = _layernorm(h, params["blk_ln_w"][l], params["blk_ln_b"][l])
        proj = dot(xn, params["blk_in_w"][l]) + params["blk_in_b"][l]
        xp, gate = proj[:, :INTER_DIM], proj[:, INTER_DIM:]
        xp = silu(xp * params["blk_conv_w"][l] + params["blk_conv_b"][l])
        xp = xp + dot(emb, params["blk_cond_w"][l]) + params["blk_cond_b"][l]

        dbc = dot(xp, params["blk_dbc_w"][l]) + params["blk_dbc_b"][l]
        dt = dbc[:, :DT_RANK]
        Bm = dbc[:, DT_RANK:DT_RANK + STATE_DIM]
        Cm = dbc[:, DT_RANK + STATE_DIM:]

        dt = jax.nn.softplus(dt + params["blk_dt_bias"][l])
        dtm = jnp.mean(dt, axis=-1, keepdims=True)
        A = -jnp.exp(params["blk_a_log"][l])
        h0 = jnp.zeros((B, STATE_DIM), jnp.float32)       # initial scan state
        hstate = (jnp.exp(A * dtm) * h0
                  + (Bm * dtm) * jnp.mean(xp, axis=-1, keepdims=True))
        y = jnp.sum(Cm * hstate, axis=-1, keepdims=True) + xp * params["blk_d"][l]
        y = dot(y * silu(gate), params["blk_out_w"][l]) + params["blk_out_b"][l]
        h = res + y

    xn = _layernorm(h, params["out_norm_w"], params["out_norm_b"])
    return dot(xn, params["out_w"]) + params["out_b"]


# ----------------------------- main -------------------------------------------
if __name__ == "__main__":
    key = jax.random.PRNGKey(0)
    kp, kx, kt, kc = jax.random.split(key, 4)

    params = init_params(kp)
    packed = pack_params(params)

    B = 2
    x = jax.random.normal(kx, (B, INPUT_DIM), jnp.float32)
    timestep = jax.random.randint(kt, (B,), 0, 1000).astype(jnp.float32)
    condition = jax.random.normal(kc, (B, CONDITION_DIM), jnp.float32)

    out = jax.jit(forward)(packed, x, timestep, condition)
    out = jax.block_until_ready(out)

    ref = reference_forward(params, x, timestep, condition)
    assert out.shape == (B, INPUT_DIM)
    max_err = float(jnp.max(jnp.abs(out - ref)))
    # 200x tighter than before; remaining margin covers MXU pass-decomposition
    # and EUP transcendental-approximation differences between Mosaic and XLA.
    assert jnp.allclose(out, ref, rtol=1e-4, atol=1e-4), \
        f"Pallas output mismatch vs JAX reference (max abs err = {max_err})"

    print("KERNEL_OK")
</pallas_src>

<mosaic_0001>
module attributes {stable_mosaic.version = 11 : i64} {
  func.func @fused_forward_kernel(%arg0: memref<2x56xf32, #tpu.memory_space<vmem>>, %arg1: memref<600x192xf32, #tpu.memory_space<vmem>>, %arg2: memref<24x192xf32, #tpu.memory_space<vmem>>, %arg3: memref<2x16xf32, #tpu.memory_space<vmem>>) attributes {dimension_semantics = [], scalar_prefetch = 0 : i64, scratch_operands = 0 : i64, tpu.core_type = #tpu.core_type<tc>} {
    %c0 = arith.constant 0 : index
    %c0_0 = arith.constant 0 : index
    %0 = vector.load %arg0[%c0, %c0_0] : memref<2x56xf32, #tpu.memory_space<vmem>>, vector<2x56xf32>
    %c0_1 = arith.constant 0 : index
    %c0_2 = arith.constant 0 : index
    %1 = vector.load %arg1[%c0_1, %c0_2] : memref<600x192xf32, #tpu.memory_space<vmem>>, vector<56x192xf32>
    %cst = arith.constant dense<0.000000e+00> : vector<2x192xf32>
    %2 = tpu.matmul %0, %1, %cst {dimension_numbers = #tpu.dot_dimension_numbers<[1], [0], [0], [1], [0, 0, 1, 1], [], []>} : vector<2x56xf32>, vector<56x192xf32>, vector<2x192xf32> -> vector<2x192xf32>
    %c0_3 = arith.constant 0 : index
    %c0_4 = arith.constant 0 : index
    %3 = vector.load %arg2[%c0_3, %c0_4] : memref<24x192xf32, #tpu.memory_space<vmem>>, vector<1x192xf32>
    %4 = vector.broadcast %3 : vector<1x192xf32> to vector<2x192xf32>
    %5 = arith.addf %2, %4 : vector<2x192xf32>
    %6 = vector.extract_strided_slice %5 {offsets = [0, 0], sizes = [2, 32], strides = [1, 1]} : vector<2x192xf32> to vector<2x32xf32>
    %7 = vector.extract_strided_slice %5 {offsets = [0, 32], sizes = [2, 160], strides = [1, 1]} : vector<2x192xf32> to vector<2x160xf32>
    %cst_5 = arith.constant 5.000000e-01 : f32
    %8 = vector.broadcast %cst_5 : f32 to vector<2x160xf32>
    %9 = arith.mulf %8, %7 : vector<2x160xf32>
    %10 = math.tanh %9 : vector<2x160xf32>
    %cst_6 = arith.constant 1.000000e+00 : f32
    %11 = vector.broadcast %cst_6 : f32 to vector<2x160xf32>
    %12 = arith.addf %10, %11 : vector<2x160xf32>
    %cst_7 = arith.constant 5.000000e-01 : f32
    %13 = vector.broadcast %cst_7 : f32 to vector<2x160xf32>
    %14 = arith.mulf %13, %12 : vector<2x160xf32>
    %15 = arith.mulf %7, %14 : vector<2x160xf32>
    %c56 = arith.constant 56 : index
    %c0_8 = arith.constant 0 : index
    %16 = vector.load %arg1[%c56, %c0_8] : memref<600x192xf32, #tpu.memory_space<vmem>>, vector<160x32xf32>
    %cst_9 = arith.constant dense<0.000000e+00> : vector<2x32xf32>
    %17 = tpu.matmul %15, %16, %cst_9 {dimension_numbers = #tpu.dot_dimension_numbers<[1], [0], [0], [1], [0, 0, 1, 1], [], []>} : vector<2x160xf32>, vector<160x32xf32>, vector<2x32xf32> -> vector<2x32xf32>
    %c1 = arith.constant 1 : index
    %c0_10 = arith.constant 0 : index
    %18 = vector.load %arg2[%c1, %c0_10] : memref<24x192xf32, #tpu.memory_space<vmem>>, vector<1x32xf32>
    %19 = vector.broadcast %18 : vector<1x32xf32> to vector<2x32xf32>
    %20 = arith.addf %17, %19 : vector<2x32xf32>
    %c216 = arith.constant 216 : index
    %c0_11 = arith.constant 0 : index
    %21 = vector.load %arg1[%c216, %c0_11] : memref<600x192xf32, #tpu.memory_space<vmem>>, vector<32x128xf32>
    %cst_12 = arith.constant dense<0.000000e+00> : vector<2x128xf32>
    %22 = tpu.matmul %20, %21, %cst_12 {dimension_numbers = #tpu.dot_dimension_numbers<[1], [0], [0], [1], [0, 0, 1, 1], [], []>} : vector<2x32xf32>, vector<32x128xf32>, vector<2x128xf32> -> vector<2x128xf32>
    %c2 = arith.constant 2 : index
    %c0_13 = arith.constant 0 : index
    %23 = vector.load %arg2[%c2, %c0_13] : memref<24x192xf32, #tpu.memory_space<vmem>>, vector<1x128xf32>
    %24 = vector.broadcast %23 : vector<1x128xf32> to vector<2x128xf32>
    %25 = arith.addf %22, %24 : vector<2x128xf32>
    %c6 = arith.constant 6 : index
    %c0_14 = arith.constant 0 : index
    %26 = vector.load %arg2[%c6, %c0_14] : memref<24x192xf32, #tpu.memory_space<vmem>>, vector<1x32xf32>
    %c7 = arith.constant 7 : index
    %c0_15 = arith.constant 0 : index
    %27 = vector.load %arg2[%c7, %c0_15] : memref<24x192xf32, #tpu.memory_space<vmem>>, vector<1x32xf32>
    %cst_16 = arith.constant dense<0.000000e+00> : vector<2xf32>
    %28 = vector.multi_reduction <add>, %6, %cst_16 [1] : vector<2x32xf32> to vector<2xf32>
    %29 = vector.shape_cast %28 : vector<2xf32> to vector<2x1xf32>
    %cst_17 = arith.constant 3.200000e+01 : f32
    %30 = vector.broadcast %cst_17 : f32 to vector<2x1xf32>
    %31 = arith.divf %29, %30 : vector<2x1xf32>
    %32 = vector.broadcast %31 : vector<2x1xf32> to vector<2x32xf32>
    %33 = arith.subf %6, %32 : vector<2x32xf32>
    %34 = arith.mulf %33, %33 : vector<2x32xf32>
    %cst_18 = arith.constant dense<0.000000e+00> : vector<2xf32>
    %35 = vector.multi_reduction <add>, %34, %cst_18 [1] : vector<2x32xf32> to vector<2xf32>
    %36 = vector.shape_cast %35 : vector<2xf32> to vector<2x1xf32>
    %cst_19 = arith.constant 3.200000e+01 : f32
    %37 = vector.broadcast %cst_19 : f32 to vector<2x1xf32>
    %38 = arith.divf %36, %37 : vector<2x1xf32>
    %39 = vector.broadcast %31 : vector<2x1xf32> to vector<2x32xf32>
    %40 = arith.subf %6, %39 : vector<2x32xf32>
    %cst_20 = arith.constant 9.99999974E-6 : f32
    %41 = vector.broadcast %cst_20 : f32 to vector<2x1xf32>
    %42 = arith.addf %38, %41 : vector<2x1xf32>
    %43 = math.rsqrt %42 : vector<2x1xf32>
    %44 = vector.broadcast %43 : vector<2x1xf32> to vector<2x32xf32>
    %45 = arith.mulf %40, %44 : vector<2x32xf32>
    %46 = vector.broadcast %26 : vector<1x32xf32> to vector<2x32xf32>
    %47 = arith.mulf %45, %46 : vector<2x32xf32>
    %48 = vector.broadcast %27 : vector<1x32xf32> to vector<2x32xf32>
    %49 = arith.addf %47, %48 : vector<2x32xf32>
    %c248 = arith.constant 248 : index
    %c0_21 = arith.constant 0 : index
    %50 = vector.load %arg1[%c248, %c0_21] : memref<600x192xf32, #tpu.memory_space<vmem>>, vector<32x128xf32>
    %cst_22 = arith.constant dense<0.000000e+00> : vector<2x128xf32>
    %51 = tpu.matmul %49, %50, %cst_22 {dimension_numbers = #tpu.dot_dimension_numbers<[1], [0], [0], [1], [0, 0, 1, 1], [], []>} : vector<2x32xf32>, vector<32x128xf32>, vector<2x128xf32> -> vector<2x128xf32>
    %c8 = arith.constant 8 : index
    %c0_23 = arith.constant 0 : index
    %52 = vector.load %arg2[%c8, %c0_23] : memref<24x192xf32, #tpu.memory_space<vmem>>, vector<1x128xf32>
    %53 = vector.broadcast %52 : vector<1x128xf32> to vector<2x128xf32>
    %54 = arith.addf %51, %53 : vector<2x128xf32>
    %55 = vector.extract_strided_slice %54 {offsets = [0, 0], sizes = [2, 64], strides = [1, 1]} : vector<2x128xf32> to vector<2x64xf32>
    %56 = vector.extract_strided_slice %54 {offsets = [0, 64], sizes = [2, 64], strides = [1, 1]} : vector<2x128xf32> to vector<2x64xf32>
    %c9 = arith.constant 9 : index
    %c0_24 = arith.constant 0 : index
    %57 = vector.load %arg2[%c9, %c0_24] : memref<24x192xf32, #tpu.memory_space<vmem>>, vector<1x64xf32>
    %58 = vector.broadcast %57 : vector<1x64xf32> to vector<2x64xf32>
    %59 = arith.mulf %55, %58 : vector<2x64xf32>
    %c10 = arith.constant 10 : index
    %c0_25 = arith.constant 0 : index
    %60 = vector.load %arg2[%c10, %c0_25] : memref<24x192xf32, #tpu.memory_space<vmem>>, vector<1x64xf32>
    %61 = vector.broadcast %60 : vector<1x64xf32> to vector<2x64xf32>
    %62 = arith.addf %59, %61 : vector<2x64xf32>
    %cst_26 = arith.constant 5.000000e-01 : f32
    %63 = vector.broadcast %cst_26 : f32 to vector<2x64xf32>
    %64 = arith.mulf %63, %62 : vector<2x64xf32>
    %65 = math.tanh %64 : vector<2x64xf32>
    %cst_27 = arith.constant 1.000000e+00 : f32
    %66 = vector.broadcast %cst_27 : f32 to vector<2x64xf32>
    %67 = arith.addf %65, %66 : vector<2x64xf32>
    %cst_28 = arith.constant 5.000000e-01 : f32
    %68 = vector.broadcast %cst_28 : f32 to vector<2x64xf32>
    %69 = arith.mulf %68, %67 : vector<2x64xf32>
    %70 = arith.mulf %62, %69 : vector<2x64xf32>
    %71 = vector.extract_strided_slice %25 {offsets = [0, 0], sizes = [2, 64], strides = [1, 1]} : vector<2x128xf32> to vector<2x64xf32>
    %72 = arith.addf %70, %71 : vector<2x64xf32>
    %c280 = arith.constant 280 : index
    %c0_29 = arith.constant 0 : index
    %73 = vector.load %arg1[%c280, %c0_29] : memref<600x192xf32, #tpu.memory_space<vmem>>, vector<64x96xf32>
    %cst_30 = arith.constant dense<0.000000e+00> : vector<2x96xf32>
    %74 = tpu.matmul %72, %73, %cst_30 {dimension_numbers = #tpu.dot_dimension_numbers<[1], [0], [0], [1], [0, 0, 1, 1], [], []>} : vector<2x64xf32>, vector<64x96xf32>, vector<2x96xf32> -> vector<2x96xf32>
    %c11 = arith.constant 11 : index
    %c0_31 = arith.constant 0 : index
    %75 = vector.load %arg2[%c11, %c0_31] : memref<24x192xf32, #tpu.memory_space<vmem>>, vector<1x96xf32>
    %76 = vector.broadcast %75 : vector<1x96xf32> to vector<2x96xf32>
    %77 = arith.addf %74, %76 : vector<2x96xf32>
    %78 = vector.extract_strided_slice %77 {offsets = [0, 0], sizes = [2, 64], strides = [1, 1]} : vector<2x96xf32> to vector<2x64xf32>
    %c12 = arith.constant 12 : index
    %c0_32 = arith.constant 0 : index
    %79 = vector.load %arg2[%c12, %c0_32] : memref<24x192xf32, #tpu.memory_space<vmem>>, vector<1x64xf32>
    %80 = vector.broadcast %79 : vector<1x64xf32> to vector<2x64xf32>
    %81 = arith.addf %78, %80 : vector<2x64xf32>
    %cst_33 = arith.constant 0.000000e+00 : f32
    %82 = vector.broadcast %cst_33 : f32 to vector<2x64xf32>
    %83 = arith.maximumf %81, %82 : vector<2x64xf32>
    %84 = math.absf %81 : vector<2x64xf32>
    %cst_34 = arith.constant 0.000000e+00 : f32
    %85 = vector.broadcast %cst_34 : f32 to vector<2x64xf32>
    %86 = arith.subf %85, %84 : vector<2x64xf32>
    %87 = math.exp %86 : vector<2x64xf32>
    %88 = math.log1p %87 : vector<2x64xf32>
    %89 = arith.addf %83, %88 : vector<2x64xf32>
    %90 = vector.extract_strided_slice %77 {offsets = [0, 64], sizes = [2, 16], strides = [1, 1]} : vector<2x96xf32> to vector<2x16xf32>
    %91 = vector.extract_strided_slice %77 {offsets = [0, 80], sizes = [2, 16], strides = [1, 1]} : vector<2x96xf32> to vector<2x16xf32>
    %cst_35 = arith.constant dense<0.000000e+00> : vector<2xf32>
    %92 = vector.multi_reduction <add>, %89, %cst_35 [1] : vector<2x64xf32> to vector<2xf32>
    %93 = vector.shape_cast %92 : vector<2xf32> to vector<2x1xf32>
    %cst_36 = arith.constant 6.400000e+01 : f32
    %94 = vector.broadcast %cst_36 : f32 to vector<2x1xf32>
    %95 = arith.divf %93, %94 : vector<2x1xf32>
    %cst_37 = arith.constant dense<0.000000e+00> : vector<2xf32>
    %96 = vector.multi_reduction <add>, %72, %cst_37 [1] : vector<2x64xf32> to vector<2xf32>
    %97 = vector.shape_cast %96 : vector<2xf32> to vector<2x1xf32>
    %cst_38 = arith.constant 6.400000e+01 : f32
    %98 = vector.broadcast %cst_38 : f32 to vector<2x1xf32>
    %99 = arith.divf %97, %98 : vector<2x1xf32>
    %100 = vector.broadcast %95 : vector<2x1xf32> to vector<2x16xf32>
    %101 = arith.mulf %90, %100 : vector<2x16xf32>
    %102 = vector.broadcast %99 : vector<2x1xf32> to vector<2x16xf32>
    %103 = arith.mulf %101, %102 : vector<2x16xf32>
    %104 = arith.mulf %91, %103 : vector<2x16xf32>
    %cst_39 = arith.constant dense<0.000000e+00> : vector<2xf32>
    %105 = vector.multi_reduction <add>, %104, %cst_39 [1] : vector<2x16xf32> to vector<2xf32>
    %106 = vector.shape_cast %105 : vector<2xf32> to vector<2x1xf32>
    %c13 = arith.constant 13 : index
    %c0_40 = arith.constant 0 : index
    %107 = vector.load %arg2[%c13, %c0_40] : memref<24x192xf32, #tpu.memory_space<vmem>>, vector<1x64xf32>
    %108 = vector.broadcast %107 : vector<1x64xf32> to vector<2x64xf32>
    %109 = arith.mulf %72, %108 : vector<2x64xf32>
    %110 = vector.broadcast %106 : vector<2x1xf32> to vector<2x64xf32>
    %111 = arith.addf %110, %109 : vector<2x64xf32>
    %cst_41 = arith.constant 5.000000e-01 : f32
    %112 = vector.broadcast %cst_41 : f32 to vector<2x64xf32>
    %113 = arith.mulf %112, %56 : vector<2x64xf32>
    %114 = math.tanh %113 : vector<2x64xf32>
    %cst_42 = arith.constant 1.000000e+00 : f32
    %115 = vector.broadcast %cst_42 : f32 to vector<2x64xf32>
    %116 = arith.addf %114, %115 : vector<2x64xf32>
    %cst_43 = arith.constant 5.000000e-01 : f32
    %117 = vector.broadcast %cst_43 : f32 to vector<2x64xf32>
    %118 = arith.mulf %117, %116 : vector<2x64xf32>
    %119 = arith.mulf %56, %118 : vector<2x64xf32>
    %120 = arith.mulf %111, %119 : vector<2x64xf32>
    %c344 = arith.constant 344 : index
    %c0_44 = arith.constant 0 : index
    %121 = vector.load %arg1[%c344, %c0_44] : memref<600x192xf32, #tpu.memory_space<vmem>>, vector<64x32xf32>
    %cst_45 = arith.constant dense<0.000000e+00> : vector<2x32xf32>
    %122 = tpu.matmul %120, %121, %cst_45 {dimension_numbers = #tpu.dot_dimension_numbers<[1], [0], [0], [1], [0, 0, 1, 1], [], []>} : vector<2x64xf32>, vector<64x32xf32>, vector<2x32xf32> -> vector<2x32xf32>
    %c14 = arith.constant 14 : index
    %c0_46 = arith.constant 0 : index
    %123 = vector.load %arg2[%c14, %c0_46] : memref<24x192xf32, #tpu.memory_space<vmem>>, vector<1x32xf32>
    %124 = vector.broadcast %123 : vector<1x32xf32> to vector<2x32xf32>
    %125 = arith.addf %122, %124 : vector<2x32xf32>
    %126 = arith.addf %6, %125 : vector<2x32xf32>
    %c15 = arith.constant 15 : index
    %c0_47 = arith.constant 0 : index
    %127 = vector.load %arg2[%c15, %c0_47] : memref<24x192xf32, #tpu.memory_space<vmem>>, vector<1x32xf32>
    %c16 = arith.constant 16 : index
    %c0_48 = arith.constant 0 : index
    %128 = vector.load %arg2[%c16, %c0_48] : memref<24x192xf32, #tpu.memory_space<vmem>>, vector<1x32xf32>
    %cst_49 = arith.constant dense<0.000000e+00> : vector<2xf32>
    %129 = vector.multi_reduction <add>, %126, %cst_49 [1] : vector<2x32xf32> to vector<2xf32>
    %130 = vector.shape_cast %129 : vector<2xf32> to vector<2x1xf32>
    %cst_50 = arith.constant 3.200000e+01 : f32
    %131 = vector.broadcast %cst_50 : f32 to vector<2x1xf32>
    %132 = arith.divf %130, %131 : vector<2x1xf32>
    %133 = vector.broadcast %132 : vector<2x1xf32> to vector<2x32xf32>
    %134 = arith.subf %126, %133 : vector<2x32xf32>
    %135 = arith.mulf %134, %134 : vector<2x32xf32>
    %cst_51 = arith.constant dense<0.000000e+00> : vector<2xf32>
    %136 = vector.multi_reduction <add>, %135, %cst_51 [1] : vector<2x32xf32> to vector<2xf32>
    %137 = vector.shape_cast %136 : vector<2xf32> to vector<2x1xf32>
    %cst_52 = arith.constant 3.200000e+01 : f32
    %138 = vector.broadcast %cst_52 : f32 to vector<2x1xf32>
    %139 = arith.divf %137, %138 : vector<2x1xf32>
    %140 = vector.broadcast %132 : vector<2x1xf32> to vector<2x32xf32>
    %141 = arith.subf %126, %140 : vector<2x32xf32>
    %cst_53 = arith.constant 9.99999974E-6 : f32
    %142 = vector.broadcast %cst_53 : f32 to vector<2x1xf32>
    %143 = arith.addf %139, %142 : vector<2x1xf32>
    %144 = math.rsqrt %143 : vector<2x1xf32>
    %145 = vector.broadcast %144 : vector<2x1xf32> to vector<2x32xf32>
    %146 = arith.mulf %141, %145 : vector<2x32xf32>
    %147 = vector.broadcast %127 : vector<1x32xf32> to vector<2x32xf32>
    %148 = arith.mulf %146, %147 : vector<2x32xf32>
    %149 = vector.broadcast %128 : vector<1x32xf32> to vector<2x32xf32>
    %150 = arith.addf %148, %149 : vector<2x32xf32>
    %c408 = arith.constant 408 : index
    %c0_54 = arith.constant 0 : index
    %151 = vector.load %arg1[%c408, %c0_54] : memref<600x192xf32, #tpu.memory_space<vmem>>, vector<32x128xf32>
    %cst_55 = arith.constant dense<0.000000e+00> : vector<2x128xf32>
    %152 = tpu.matmul %150, %151, %cst_55 {dimension_numbers = #tpu.dot_dimension_numbers<[1], [0], [0], [1], [0, 0, 1, 1], [], []>} : vector<2x32xf32>, vector<32x128xf32>, vector<2x128xf32> -> vector<2x128xf32>
    %c17 = arith.constant 17 : index
    %c0_56 = arith.constant 0 : index
    %153 = vector.load %arg2[%c17, %c0_56] : memref<24x192xf32, #tpu.memory_space<vmem>>, vector<1x128xf32>
    %154 = vector.broadcast %153 : vector<1x128xf32> to vector<2x128xf32>
    %155 = arith.addf %152, %154 : vector<2x128xf32>
    %156 = vector.extract_strided_slice %155 {offsets = [0, 0], sizes = [2, 64], strides = [1, 1]} : vector<2x128xf32> to vector<2x64xf32>
    %157 = vector.extract_strided_slice %155 {offsets = [0, 64], sizes = [2, 64], strides = [1, 1]} : vector<2x128xf32> to vector<2x64xf32>
    %c18 = arith.constant 18 : index
    %c0_57 = arith.constant 0 : index
    %158 = vector.load %arg2[%c18, %c0_57] : memref<24x192xf32, #tpu.memory_space<vmem>>, vector<1x64xf32>
    %159 = vector.broadcast %158 : vector<1x64xf32> to vector<2x64xf32>
    %160 = arith.mulf %156, %159 : vector<2x64xf32>
    %c19 = arith.constant 19 : index
    %c0_58 = arith.constant 0 : index
    %161 = vector.load %arg2[%c19, %c0_58] : memref<24x192xf32, #tpu.memory_space<vmem>>, vector<1x64xf32>
    %162 = vector.broadcast %161 : vector<1x64xf32> to vector<2x64xf32>
    %163 = arith.addf %160, %162 : vector<2x64xf32>
    %cst_59 = arith.constant 5.000000e-01 : f32
    %164 = vector.broadcast %cst_59 : f32 to vector<2x64xf32>
    %165 = arith.mulf %164, %163 : vector<2x64xf32>
    %166 = math.tanh %165 : vector<2x64xf32>
    %cst_60 = arith.constant 1.000000e+00 : f32
    %167 = vector.broadcast %cst_60 : f32 to vector<2x64xf32>
    %168 = arith.addf %166, %167 : vector<2x64xf32>
    %cst_61 = arith.constant 5.000000e-01 : f32
    %169 = vector.broadcast %cst_61 : f32 to vector<2x64xf32>
    %170 = arith.mulf %169, %168 : vector<2x64xf32>
    %171 = arith.mulf %163, %170 : vector<2x64xf32>
    %172 = vector.extract_strided_slice %25 {offsets = [0, 64], sizes = [2, 64], strides = [1, 1]} : vector<2x128xf32> to vector<2x64xf32>
    %173 = arith.addf %171, %172 : vector<2x64xf32>
    %c440 = arith.constant 440 : index
    %c0_62 = arith.constant 0 : index
    %174 = vector.load %arg1[%c440, %c0_62] : memref<600x192xf32, #tpu.memory_space<vmem>>, vector<64x96xf32>
    %cst_63 = arith.constant dense<0.000000e+00> : vector<2x96xf32>
    %175 = tpu.matmul %173, %174, %cst_63 {dimension_numbers = #tpu.dot_dimension_numbers<[1], [0], [0], [1], [0, 0, 1, 1], [], []>} : vector<2x64xf32>, vector<64x96xf32>, vector<2x96xf32> -> vector<2x96xf32>
    %c20 = arith.constant 20 : index
    %c0_64 = arith.constant 0 : index
    %176 = vector.load %arg2[%c20, %c0_64] : memref<24x192xf32, #tpu.memory_space<vmem>>, vector<1x96xf32>
    %177 = vector.broadcast %176 : vector<1x96xf32> to vector<2x96xf32>
    %178 = arith.addf %175, %177 : vector<2x96xf32>
    %179 = vector.extract_strided_slice %178 {offsets = [0, 0], sizes = [2, 64], strides = [1, 1]} : vector<2x96xf32> to vector<2x64xf32>
    %c21 = arith.constant 21 : index
    %c0_65 = arith.constant 0 : index
    %180 = vector.load %arg2[%c21, %c0_65] : memref<24x192xf32, #tpu.memory_space<vmem>>, vector<1x64xf32>
    %181 = vector.broadcast %180 : vector<1x64xf32> to vector<2x64xf32>
    %182 = arith.addf %179, %181 : vector<2x64xf32>
    %cst_66 = arith.constant 0.000000e+00 : f32
    %183 = vector.broadcast %cst_66 : f32 to vector<2x64xf32>
    %184 = arith.maximumf %182, %183 : vector<2x64xf32>
    %185 = math.absf %182 : vector<2x64xf32>
    %cst_67 = arith.constant 0.000000e+00 : f32
    %186 = vector.broadcast %cst_67 : f32 to vector<2x64xf32>
    %187 = arith.subf %186, %185 : vector<2x64xf32>
    %188 = math.exp %187 : vector<2x64xf32>
    %189 = math.log1p %188 : vector<2x64xf32>
    %190 = arith.addf %184, %189 : vector<2x64xf32>
    %191 = vector.extract_strided_slice %178 {offsets = [0, 64], sizes = [2, 16], strides = [1, 1]} : vector<2x96xf32> to vector<2x16xf32>
    %192 = vector.extract_strided_slice %178 {offsets = [0, 80], sizes = [2, 16], strides = [1, 1]} : vector<2x96xf32> to vector<2x16xf32>
    %cst_68 = arith.constant dense<0.000000e+00> : vector<2xf32>
    %193 = vector.multi_reduction <add>, %190, %cst_68 [1] : vector<2x64xf32> to vector<2xf32>
    %194 = vector.shape_cast %193 : vector<2xf32> to vector<2x1xf32>
    %cst_69 = arith.constant 6.400000e+01 : f32
    %195 = vector.broadcast %cst_69 : f32 to vector<2x1xf32>
    %196 = arith.divf %194, %195 : vector<2x1xf32>
    %cst_70 = arith.constant dense<0.000000e+00> : vector<2xf32>
    %197 = vector.multi_reduction <add>, %173, %cst_70 [1] : vector<2x64xf32> to vector<2xf32>
    %198 = vector.shape_cast %197 : vector<2xf32> to vector<2x1xf32>
    %cst_71 = arith.constant 6.400000e+01 : f32
    %199 = vector.broadcast %cst_71 : f32 to vector<2x1xf32>
    %200 = arith.divf %198, %199 : vector<2x1xf32>
    %201 = vector.broadcast %196 : vector<2x1xf32> to vector<2x16xf32>
    %202 = arith.mulf %191, %201 : vector<2x16xf32>
    %203 = vector.broadcast %200 : vector<2x1xf32> to vector<2x16xf32>
    %204 = arith.mulf %202, %203 : vector<2x16xf32>
    %205 = arith.mulf %192, %204 : vector<2x16xf32>
    %cst_72 = arith.constant dense<0.000000e+00> : vector<2xf32>
    %206 = vector.multi_reduction <add>, %205, %cst_72 [1] : vector<2x16xf32> to vector<2xf32>
    %207 = vector.shape_cast %206 : vector<2xf32> to vector<2x1xf32>
    %c22 = arith.constant 22 : index
    %c0_73 = arith.constant 0 : index
    %208 = vector.load %arg2[%c22, %c0_73] : memref<24x192xf32, #tpu.memory_space<vmem>>, vector<1x64xf32>
    %209 = vector.broadcast %208 : vector<1x64xf32> to vector<2x64xf32>
    %210 = arith.mulf %173, %209 : vector<2x64xf32>
    %211 = vector.broadcast %207 : vector<2x1xf32> to vector<2x64xf32>
    %212 = arith.addf %211, %210 : vector<2x64xf32>
    %cst_74 = arith.constant 5.000000e-01 : f32
    %213 = vector.broadcast %cst_74 : f32 to vector<2x64xf32>
    %214 = arith.mulf %213, %157 : vector<2x64xf32>
    %215 = math.tanh %214 : vector<2x64xf32>
    %cst_75 = arith.constant 1.000000e+00 : f32
    %216 = vector.broadcast %cst_75 : f32 to vector<2x64xf32>
    %217 = arith.addf %215, %216 : vector<2x64xf32>
    %cst_76 = arith.constant 5.000000e-01 : f32
    %218 = vector.broadcast %cst_76 : f32 to vector<2x64xf32>
    %219 = arith.mulf %218, %217 : vector<2x64xf32>
    %220 = arith.mulf %157, %219 : vector<2x64xf32>
    %221 = arith.mulf %212, %220 : vector<2x64xf32>
    %c504 = arith.constant 504 : index
    %c0_77 = arith.constant 0 : index
    %222 = vector.load %arg1[%c504, %c0_77] : memref<600x192xf32, #tpu.memory_space<vmem>>, vector<64x32xf32>
    %cst_78 = arith.constant dense<0.000000e+00> : vector<2x32xf32>
    %223 = tpu.matmul %221, %222, %cst_78 {dimension_numbers = #tpu.dot_dimension_numbers<[1], [0], [0], [1], [0, 0, 1, 1], [], []>} : vector<2x64xf32>, vector<64x32xf32>, vector<2x32xf32> -> vector<2x32xf32>
    %c23 = arith.constant 23 : index
    %c0_79 = arith.constant 0 : index
    %224 = vector.load %arg2[%c23, %c0_79] : memref<24x192xf32, #tpu.memory_space<vmem>>, vector<1x32xf32>
    %225 = vector.broadcast %224 : vector<1x32xf32> to vector<2x32xf32>
    %226 = arith.addf %223, %225 : vector<2x32xf32>
    %227 = arith.addf %126, %226 : vector<2x32xf32>
    %c3 = arith.constant 3 : index
    %c0_80 = arith.constant 0 : index
    %228 = vector.load %arg2[%c3, %c0_80] : memref<24x192xf32, #tpu.memory_space<vmem>>, vector<1x32xf32>
    %c4 = arith.constant 4 : index
    %c0_81 = arith.constant 0 : index
    %229 = vector.load %arg2[%c4, %c0_81] : memref<24x192xf32, #tpu.memory_space<vmem>>, vector<1x32xf32>
    %cst_82 = arith.constant dense<0.000000e+00> : vector<2xf32>
    %230 = vector.multi_reduction <add>, %227, %cst_82 [1] : vector<2x32xf32> to vector<2xf32>
    %231 = vector.shape_cast %230 : vector<2xf32> to vector<2x1xf32>
    %cst_83 = arith.constant 3.200000e+01 : f32
    %232 = vector.broadcast %cst_83 : f32 to vector<2x1xf32>
    %233 = arith.divf %231, %232 : vector<2x1xf32>
    %234 = vector.broadcast %233 : vector<2x1xf32> to vector<2x32xf32>
    %235 = arith.subf %227, %234 : vector<2x32xf32>
    %236 = arith.mulf %235, %235 : vector<2x32xf32>
    %cst_84 = arith.constant dense<0.000000e+00> : vector<2xf32>
    %237 = vector.multi_reduction <add>, %236, %cst_84 [1] : vector<2x32xf32> to vector<2xf32>
    %238 = vector.shape_cast %237 : vector<2xf32> to vector<2x1xf32>
    %cst_85 = arith.constant 3.200000e+01 : f32
    %239 = vector.broadcast %cst_85 : f32 to vector<2x1xf32>
    %240 = arith.divf %238, %239 : vector<2x1xf32>
    %241 = vector.broadcast %233 : vector<2x1xf32> to vector<2x32xf32>
    %242 = arith.subf %227, %241 : vector<2x32xf32>
    %cst_86 = arith.constant 9.99999974E-6 : f32
    %243 = vector.broadcast %cst_86 : f32 to vector<2x1xf32>
    %244 = arith.addf %240, %243 : vector<2x1xf32>
    %245 = math.rsqrt %244 : vector<2x1xf32>
    %246 = vector.broadcast %245 : vector<2x1xf32> to vector<2x32xf32>
    %247 = arith.mulf %242, %246 : vector<2x32xf32>
    %248 = vector.broadcast %228 : vector<1x32xf32> to vector<2x32xf32>
    %249 = arith.mulf %247, %248 : vector<2x32xf32>
    %250 = vector.broadcast %229 : vector<1x32xf32> to vector<2x32xf32>
    %251 = arith.addf %249, %250 : vector<2x32xf32>
    %c568 = arith.constant 568 : index
    %c0_87 = arith.constant 0 : index
    %252 = vector.load %arg1[%c568, %c0_87] : memref<600x192xf32, #tpu.memory_space<vmem>>, vector<32x16xf32>
    %cst_88 = arith.constant dense<0.000000e+00> : vector<2x16xf32>
    %253 = tpu.matmul %251, %252, %cst_88 {dimension_numbers = #tpu.dot_dimension_numbers<[1], [0], [0], [1], [0, 0, 1, 1], [], []>} : vector<2x32xf32>, vector<32x16xf32>, vector<2x16xf32> -> vector<2x16xf32>
    %c5 = arith.constant 5 : index
    %c0_89 = arith.constant 0 : index
    %254 = vector.load %arg2[%c5, %c0_89] : memref<24x192xf32, #tpu.memory_space<vmem>>, vector<1x16xf32>
    %255 = vector.broadcast %254 : vector<1x16xf32> to vector<2x16xf32>
    %256 = arith.addf %253, %255 : vector<2x16xf32>
    %c0_90 = arith.constant 0 : index
    %c0_91 = arith.constant 0 : index
    %257 = vector.load %arg3[%c0_90, %c0_91] : memref<2x16xf32, #tpu.memory_space<vmem>>, vector<2x16xf32>
    tpu.vector_store %arg3[%c0_90, %c0_91], %256 {strides = array<i32>} : memref<2x16xf32, #tpu.memory_space<vmem>>, vector<2x16xf32>,
    return
  }
}

</mosaic_0001>

<llo_original>
// kernel: forward.1
$region0: #{forward.1}
  #allocation0 [shape = 'u32[]', space=smem, size = 0x4, offset = 0x4, fixed_abs, tag = 'smem constant byte address 0x4 - core index']
  #allocation1 [shape = 'u32[72,128]{1,0:T(1,128)}', space=vmem, size = 0x9000, scoped, tag = 'internal scratch']
  %s0 = inlined_call_operand.vmem [shape: f32[2,56], index: 0, kind: input, shape index: {}]
  %s1 = inlined_call_operand.vmem [shape: f32[600,192], index: 1, kind: input, shape index: {}]
  %s2 = inlined_call_operand.vmem [shape: f32[24,192], index: 2, kind: input, shape index: {}]
  %s3 = inlined_call_operand.hbm [shape: f32[2,16], index: 3, kind: output, shape index: {}]
  %s4 = sld [smem:[#allocation0]]
  $region22: #{forward.1} parent=0
    _
  %s6 = ssub.s32 1, %s4
  %s7 = scalar_select 0, %s6, %s4
  $region1: #{forward.1} parent=0
    #allocation2 [shape = 'u8[1024]{0}', space=vmem, size = 0x400, scoped, tag = 'output window, operand 0, single buffered']
    #allocation3 [shape = 's32[1]{0}', space=sflag, size = 0x4, scoped, tag = 'scoped memory for forward.1']
    %8 = vsyncpa [#allocation3], 0
    // Predicated region
    $region2: #{forward.1} parent=1 // pred_check
      _
    $region3: #{forward.1} parent=1 // pred_check_branch
      %10 = sbr.rel (0) target = $region5
    $region4: #{forward.1} parent=1 // pred_region
      _
    $region5: #{forward.1} parent=1 // pred_fallthru
      _
    // Predicated region
    $region6: #{forward.1} parent=1 // pred_check
      _
    $region7: #{forward.1} parent=1 // pred_check_branch
      %12 = sbr.rel (0) target = $region9
    $region8: #{forward.1} parent=1 // pred_region
      _
    $region9: #{forward.1} parent=1 // pred_fallthru
      _
    // Predicated region
    $region10: #{forward.1} parent=1 // pred_check
      _
    $region11: #{forward.1} parent=1 // pred_check_branch
      %14 = sbr.rel (0) target = $region13
    $region12: #{forward.1} parent=1 // pred_region
      _
    $region13: #{forward.1} parent=1 // pred_fallthru
      _
    %v15 = vld [vmem:[%s0] sm:$0x3]
    %v16 = vld [vmem:[%s1] sm:$0xff]
    %v17 = vld [vmem:[%s1 + $0x8] sm:$0xff]
    %v18 = vld [vmem:[%s1 + $0x10] sm:$0xff]
    %v19 = vld [vmem:[%s1 + $0x18] sm:$0xff]
    %v20 = vld [vmem:[%s1 + $0x20] sm:$0xff]
    %v21 = vld [vmem:[%s1 + $0x28] sm:$0xff]
    %v22 = vld [vmem:[%s1 + $0x30] sm:$0xff]
    %v23 = vld [vmem:[%s1 + $0x38] sm:$0xff]
    %v24 = vld [vmem:[%s1 + $0x40] sm:$0xff]
    %v25 = vld [vmem:[%s1 + $0x48] sm:$0xff]
    %v26 = vld [vmem:[%s1 + $0x50] sm:$0xff]
    %v27 = vld [vmem:[%s1 + $0x58] sm:$0xff]
    %v28 = vld [vmem:[%s1 + $0x60] sm:$0xff]
    %v29 = vld [vmem:[%s1 + $0x68] sm:$0xff]
    %v30 = vld [vmem:[%s2] ss:$8 sm:$0x3]
    %v32 = vperm.slane %v30, 0
    %v33 = vperm.slane %v30, 1
    %vm36 = vcmask 457728
    %v38 = vsel %vm36, %v15, 0
    %40 = vmatpush.msra.mxu0 0.0
    %41 = vmatpush.msra.mxu0 0.0
    %42 = vmatpush.msra.mxu0 0.0
    %43 = vmatpush.msra.mxu0 0.0
    %44 = vmatpush.msra.mxu0 0.0
    %45 = vmatpush.msra.mxu0 0.0
    %46 = vmatpush.msra.mxu0 0.0
    %47 = vmatpush.msra.mxu0 0.0
    %48 = vmatpush.msra.mxu0 0.0
    %49 = vmatpush.msra.mxu0 %v28
    %50 = vmatpush.msra.mxu0 %v26
    %51 = vmatpush.msra.mxu0 %v24
    %52 = vmatpush.msra.mxu0 %v22
    %53 = vmatpush.msra.mxu0 %v20
    %54 = vmatpush.msra.mxu0 %v18
    %55 = vmatpush.msra.mxu0 %v16
    %56 = vmatmul.f32.gmra.mxu0 %v38
    %v57 = vpop.f32.mrf.mxu0
    %v58 = vadd.f32 %v32, %v57
    %59 = vdwg.mxu0
    %60 = vmatpush.msra.mxu0 0.0
    %61 = vmatpush.msra.mxu0 0.0
    %62 = vmatpush.msra.mxu0 0.0
    %63 = vmatpush.msra.mxu0 0.0
    %64 = vmatpush.msra.mxu0 0.0
    %65 = vmatpush.msra.mxu0 0.0
    %66 = vmatpush.msra.mxu0 0.0
    %67 = vmatpush.msra.mxu0 0.0
    %68 = vmatpush.msra.mxu0 0.0
    %69 = vmatpush.msra.mxu0 %v29
    %70 = vmatpush.msra.mxu0 %v27
    %71 = vmatpush.msra.mxu0 %v25
    %72 = vmatpush.msra.mxu0 %v23
    %73 = vmatpush.msra.mxu0 %v21
    %74 = vmatpush.msra.mxu0 %v19
    %75 = vmatpush.msra.mxu0 %v17
    %76 = vmatmul.f32.gmra.mxu0 %v38
    %v77 = vpop.f32.mrf.mxu0
    %v78 = vadd.f32 %v33, %v77
    %79 = vdwg.mxu0
    %v80 = vmul.f32 %v58, 0.5
    %v81 = vmul.f32 %v78, 0.5
    %v82 = vtanh.pop %v80
    %v83 = vtanh.pop %v81
    %v84 = vadd.f32 %v82, 1.0
    %v85 = vadd.f32 %v83, 1.0
    %v86 = vmul.f32 %v84, 0.5
    %v87 = vmul.f32 %v85, 0.5
    %v88 = vmul.f32 %v58, %v86
    %v89 = vmul.f32 %v78, %v87
    %v90 = vld [vmem:[%s1 + $0x70] sm:$0xff]
    %v91 = vld [vmem:[%s1 + $0x80] sm:$0xff]
    %v92 = vld [vmem:[%s1 + $0x90] sm:$0xff]
    %v93 = vld [vmem:[%s1 + $0xa0] sm:$0xff]
    %v94 = vld [vmem:[%s1 + $0xb0] sm:$0xff]
    %v95 = vld [vmem:[%s1 + $0xc0] sm:$0xff]
    %v96 = vld [vmem:[%s1 + $0xd0] sm:$0xff]
    %v97 = vld [vmem:[%s1 + $0xe0] sm:$0xff]
    %v98 = vld [vmem:[%s1 + $0xf0] sm:$0xff]
    %v99 = vld [vmem:[%s1 + $0x100] sm:$0xff]
    %v100 = vld [vmem:[%s1 + $0x110] sm:$0xff]
    %v101 = vld [vmem:[%s1 + $0x120] sm:$0xff]
    %v102 = vld [vmem:[%s1 + $0x130] sm:$0xff]
    %v103 = vld [vmem:[%s1 + $0x140] sm:$0xff]
    %v104 = vld [vmem:[%s1 + $0x150] sm:$0xff]
    %v105 = vld [vmem:[%s1 + $0x160] sm:$0xff]
    %v106 = vld [vmem:[%s1 + $0x170] sm:$0xff]
    %v107 = vld [vmem:[%s1 + $0x180] sm:$0xff]
    %v108 = vld [vmem:[%s1 + $0x190] sm:$0xff]
    %v109 = vld [vmem:[%s1 + $0x1a0] sm:$0xff]
    %v110 = vld [vmem:[%s2 + $0x1] ss:$0 sm:$0xff]
    %113 = vrot.lane.b32.xlu0 %v88, 96
    %v114 = vpop.permute.xlu0 %113
    %115 = vrot.lane.b32.xlu0 %v89, 96
    %v116 = vpop.permute.xlu0 %115
    %vm117 = vcmask 785408
    %v118 = vsel %vm117, %v114, %v116
    %vm120 = vcmask 261120
    %v121 = vsel %vm120, %v116, 0
    %123 = vmatpush.msra.mxu0 %v105
    %124 = vmatpush.msra.mxu0 %v104
    %125 = vmatpush.msra.mxu0 %v103
    %126 = vmatpush.msra.mxu0 %v102
    %127 = vmatpush.msra.mxu0 %v101
    %128 = vmatpush.msra.mxu0 %v100
    %129 = vmatpush.msra.mxu0 %v99
    %130 = vmatpush.msra.mxu0 %v98
    %131 = vmatpush.msra.mxu0 %v97
    %132 = vmatpush.msra.mxu0 %v96
    %133 = vmatpush.msra.mxu0 %v95
    %134 = vmatpush.msra.mxu0 %v94
    %135 = vmatpush.msra.mxu0 %v93
    %136 = vmatpush.msra.mxu0 %v92
    %137 = vmatpush.msra.mxu0 %v91
    %138 = vmatpush.msra.mxu0 %v90
    %139 = vmatmul.f32.gmra.mxu0 %v118
    %v140 = vpop.f32.mrf.mxu0
    %v141 = vadd.f32 %v110, %v140
    %142 = vdwg.mxu0
    %143 = vmatpush.msra.mxu0 0.0
    %144 = vmatpush.msra.mxu0 0.0
    %145 = vmatpush.msra.mxu0 0.0
    %146 = vmatpush.msra.mxu0 0.0
    %147 = vmatpush.msra.mxu0 0.0
    %148 = vmatpush.msra.mxu0 0.0
    %149 = vmatpush.msra.mxu0 0.0
    %150 = vmatpush.msra.mxu0 0.0
    %151 = vmatpush.msra.mxu0 0.0
    %152 = vmatpush.msra.mxu0 0.0
    %153 = vmatpush.msra.mxu0 0.0
    %154 = vmatpush.msra.mxu0 0.0
    %155 = vmatpush.msra.mxu0 %v109
    %156 = vmatpush.msra.mxu0 %v108
    %157 = vmatpush.msra.mxu0 %v107
    %158 = vmatpush.msra.mxu0 %v106
    %159 = vmatmul.f32.gmra.mxu0 %v121
    %v160 = vpop.f32.mrf.mxu0
    %v161 = vadd.f32 %v141, %v160
    %162 = vdwg.mxu0
    %v163 = vld [vmem:[%s1 + $0x1b0] sm:$0xff]
    %v164 = vld [vmem:[%s1 + $0x1c0] sm:$0xff]
    %v165 = vld [vmem:[%s1 + $0x1d0] sm:$0xff]
    %v166 = vld [vmem:[%s1 + $0x1e0] sm:$0xff]
    %v167 = vld [vmem:[%s2 + $0x2] ss:$0 sm:$0xff]
    %v169 = vsel %vm120, %v161, 0
    %171 = vmatpush.msra.mxu0 0.0
    %172 = vmatpush.msra.mxu0 0.0
    %173 = vmatpush.msra.mxu0 0.0
    %174 = vmatpush.msra.mxu0 0.0
    %175 = vmatpush.msra.mxu0 0.0
    %176 = vmatpush.msra.mxu0 0.0
    %177 = vmatpush.msra.mxu0 0.0
    %178 = vmatpush.msra.mxu0 0.0
    %179 = vmatpush.msra.mxu0 0.0
    %180 = vmatpush.msra.mxu0 0.0
    %181 = vmatpush.msra.mxu0 0.0
    %182 = vmatpush.msra.mxu0 0.0
    %183 = vmatpush.msra.mxu0 %v166
    %184 = vmatpush.msra.mxu0 %v165
    %185 = vmatpush.msra.mxu0 %v164
    %186 = vmatpush.msra.mxu0 %v163
    %187 = vmatmul.f32.gmra.mxu0 %v169
    %v188 = vpop.f32.mrf.mxu0
    %v189 = vadd.f32 %v167, %v188
    %190 = vdwg.mxu0
    %v191 = vld [vmem:[%s2 + $0x6] ss:$0 sm:$0xff]
    %v192 = vld [vmem:[%s2 + $0x7] ss:$0 sm:$0xff]
    %vm193 = vcmask 254976
    %v194 = vsel %vm193, %v58, 0.0
    %195 = vadd.xlane.f32.xlu0 %v194
    %v196 = vpop.xlane.xlu0 %195
    %v197 = vrcp.pop 32.0
    %v198 = vmul.f32 32.0, %v197
    %v199 = vsub.f32 1.0, %v198
    %v200 = vmul.f32 %v197, %v199
    %v201 = vadd.f32 %v197, %v200
    %vm202 = vweird.f32 %v197
    %v203 = vsel %vm202, %v197, %v201
    %v204 = vmul.f32 %v196, %v203
    %v205 = vsub.f32 %v58, %v204
    %v206 = vmul.f32 %v205, %v205
    %v207 = vsel %vm193, %v206, 0.0
    %208 = vadd.xlane.f32.xlu0 %v207
    %v209 = vpop.xlane.xlu0 %208
    %v210 = vmul.f32 %v209, %v203
    %v211 = vadd.f32 %v210, 1e-05
    %v212 = vrsqrt.pop %v211
    %v213 = vmul.f32 %v212, %v211
    %v214 = vmul.f32 %v213, %v212
    %v215 = vmul.f32 0.5, %v214
    %v216 = vsub.f32 1.5, %v215
    %v217 = vmul.f32 %v212, %v216
    %vm218 = vweird.f32 %v211
    %vm219 = vweird.f32 %v212
    %vm220 = vmor %vm218, %vm219
    %v221 = vsel %vm220, %v212, %v217
    %v222 = vmul.f32 %v205, %v221
    %v223 = vmul.f32 %v222, %v191
    %v224 = vadd.f32 %v223, %v192
    %v225 = vld [vmem:[%s1 + $0x1f0] sm:$0xff]
    %v226 = vld [vmem:[%s1 + $0x200] sm:$0xff]
    %v227 = vld [vmem:[%s1 + $0x210] sm:$0xff]
    %v228 = vld [vmem:[%s1 + $0x220] sm:$0xff]
    %v229 = vld [vmem:[%s2 + $0x10] ss:$0 sm:$0xff]
    %v231 = vsel %vm120, %v224, 0
    %233 = vmatpush.msra.mxu0 0.0
    %234 = vmatpush.msra.mxu0 0.0
    %235 = vmatpush.msra.mxu0 0.0
    %236 = vmatpush.msra.mxu0 0.0
    %237 = vmatpush.msra.mxu0 0.0
    %238 = vmatpush.msra.mxu0 0.0
    %239 = vmatpush.msra.mxu0 0.0
    %240 = vmatpush.msra.mxu0 0.0
    %241 = vmatpush.msra.mxu0 0.0
    %242 = vmatpush.msra.mxu0 0.0
    %243 = vmatpush.msra.mxu0 0.0
    %244 = vmatpush.msra.mxu0 0.0
    %245 = vmatpush.msra.mxu0 %v228
    %246 = vmatpush.msra.mxu0 %v227
    %247 = vmatpush.msra.mxu0 %v226
    %248 = vmatpush.msra.mxu0 %v225
    %249 = vmatmul.f32.gmra.mxu0 %v231
    %v250 = vpop.f32.mrf.mxu0
    %v251 = vadd.f32 %v229, %v250
    %252 = vdwg.mxu0
    %v253 = vld [vmem:[%s2 + $0x11] ss:$0 sm:$0xff]
    %v254 = vmul.f32 %v251, %v253
    %v255 = vld [vmem:[%s2 + $0x12] ss:$0 sm:$0xff]
    %v256 = vadd.f32 %v254, %v255
    %v257 = vmul.f32 %v256, 0.5
    %v258 = vtanh.pop %v257
    %v259 = vadd.f32 %v258, 1.0
    %v260 = vmul.f32 %v259, 0.5
    %v261 = vmul.f32 %v256, %v260
    %v262 = vadd.f32 %v261, %v189
    %v263 = vld [vmem:[%s1 + $0x230] sm:$0xff]
    %v264 = vld [vmem:[%s1 + $0x240] sm:$0xff]
    %v265 = vld [vmem:[%s1 + $0x250] sm:$0xff]
    %v266 = vld [vmem:[%s1 + $0x260] sm:$0xff]
    %v267 = vld [vmem:[%s1 + $0x270] sm:$0xff]
    %v268 = vld [vmem:[%s1 + $0x280] sm:$0xff]
    %v269 = vld [vmem:[%s1 + $0x290] sm:$0xff]
    %v270 = vld [vmem:[%s1 + $0x2a0] sm:$0xff]
    %v271 = vld [vmem:[%s2 + $0x13] ss:$0 sm:$0xff]
    %vm272 = vcmask 523264
    %v274 = vsel %vm272, %v262, 0
    %276 = vmatpush.msra.mxu0 0.0
    %277 = vmatpush.msra.mxu0 0.0
    %278 = vmatpush.msra.mxu0 0.0
    %279 = vmatpush.msra.mxu0 0.0
    %280 = vmatpush.msra.mxu0 0.0
    %281 = vmatpush.msra.mxu0 0.0
    %282 = vmatpush.msra.mxu0 0.0
    %283 = vmatpush.msra.mxu0 0.0
    %284 = vmatpush.msra.mxu0 %v270
    %285 = vmatpush.msra.mxu0 %v269
    %286 = vmatpush.msra.mxu0 %v268
    %287 = vmatpush.msra.mxu0 %v267
    %288 = vmatpush.msra.mxu0 %v266
    %289 = vmatpush.msra.mxu0 %v265
    %290 = vmatpush.msra.mxu0 %v264
    %291 = vmatpush.msra.mxu0 %v263
    %292 = vmatmul.f32.gmra.mxu0 %v274
    %v293 = vpop.f32.mrf.mxu0
    %v294 = vadd.f32 %v271, %v293
    %295 = vdwg.mxu0
    %v296 = vld [vmem:[%s2 + $0x14] ss:$0 sm:$0xff]
    %v297 = vadd.f32 %v294, %v296
    %v298 = vmax.f32 %v297, 0.0
    %v299 = vand.u32 2147483647, %v297
    %v300 = vsub.f32 0.0, %v299
    %v301 = vmul.f32 %v300, 1.442695
    %v302 = vpow.pop %v301
    %v303 = vadd.f32 %v302, 1.0
    %v304 = vlog2.pop %v303
    %v305 = vmul.f32 %v304, 0.6931472
    %v306 = vmul.f32 -0.5, %v302
    %v307 = vadd.f32 %v306, 1.0
    %v308 = vmul.f32 %v307, %v302
    %v309 = vand.u32 2147483647, %v302
    %vm310 = vcmp.lt.f32.partialorder %v309, 0.0004427343
    %v311 = vsel %vm310, %v308, %v305
    %v312 = vadd.f32 %v298, %v311
    %vm313 = vcmask 517120
    %v314 = vsel %vm313, %v312, 0.0
    %315 = vadd.xlane.f32.xlu0 %v314
    %v316 = vpop.xlane.xlu0 %315
    %v317 = vrcp.pop 64.0
    %v318 = vmul.f32 64.0, %v317
    %v319 = vsub.f32 1.0, %v318
    %v320 = vmul.f32 %v317, %v319
    %v321 = vadd.f32 %v317, %v320
    %vm322 = vweird.f32 %v317
    %v323 = vsel %vm322, %v317, %v321
    %v324 = vmul.f32 %v316, %v323
    %v325 = vsel %vm313, %v262, 0.0
    %326 = vadd.xlane.f32.xlu0 %v325
    %v327 = vpop.xlane.xlu0 %326
    %v328 = vmul.f32 %v327, %v323
    %v329 = vmul.f32 %v294, %v324
    %v330 = vmul.f32 %v329, %v328
    %332 = vrot.lane.b32.xlu0 %v330, 16
    %v333 = vpop.permute.xlu0 %332
    %v335 = vmul.f32 %v294, %v333
    %337 = vrot.lane.b32.xlu0 %v335, 48
    %v338 = vpop.permute.xlu0 %337
    %vm340 = vcmask 123904
    %v341 = vsel %vm340, %v338, 0.0
    %342 = vadd.xlane.f32.xlu0 %v341
    %v343 = vpop.xlane.xlu0 %342
    %v344 = vld [vmem:[%s2 + $0x15] ss:$0 sm:$0xff]
    %v345 = vmul.f32 %v262, %v344
    %v346 = vadd.f32 %v343, %v345
    %v347 = vmul.f32 %v251, 0.5
    %v348 = vtanh.pop %v347
    %v349 = vadd.f32 %v348, 1.0
    %v350 = vmul.f32 %v349, 0.5
    %v351 = vmul.f32 %v251, %v350
    %353 = vrot.lane.b32.xlu0 %v351, 64
    %v354 = vpop.permute.xlu0 %353
    %v356 = vmul.f32 %v346, %v354
    %v357 = vld [vmem:[%s1 + $0x2b0] sm:$0xff]
    %v358 = vld [vmem:[%s1 + $0x2c0] sm:$0xff]
    %v359 = vld [vmem:[%s1 + $0x2d0] sm:$0xff]
    %v360 = vld [vmem:[%s1 + $0x2e0] sm:$0xff]
    %v361 = vld [vmem:[%s1 + $0x2f0] sm:$0xff]
    %v362 = vld [vmem:[%s1 + $0x300] sm:$0xff]
    %v363 = vld [vmem:[%s1 + $0x310] sm:$0xff]
    %v364 = vld [vmem:[%s1 + $0x320] sm:$0xff]
    %v365 = vld [vmem:[%s2 + $0x16] ss:$0 sm:$0xff]
    %v367 = vsel %vm272, %v356, 0
    %369 = vmatpush.msra.mxu0 0.0
    %370 = vmatpush.msra.mxu0 0.0
    %371 = vmatpush.msra.mxu0 0.0
    %372 = vmatpush.msra.mxu0 0.0
    %373 = vmatpush.msra.mxu0 0.0
    %374 = vmatpush.msra.mxu0 0.0
    %375 = vmatpush.msra.mxu0 0.0
    %376 = vmatpush.msra.mxu0 0.0
    %377 = vmatpush.msra.mxu0 %v364
    %378 = vmatpush.msra.mxu0 %v363
    %379 = vmatpush.msra.mxu0 %v362
    %380 = vmatpush.msra.mxu0 %v361
    %381 = vmatpush.msra.mxu0 %v360
    %382 = vmatpush.msra.mxu0 %v359
    %383 = vmatpush.msra.mxu0 %v358
    %384 = vmatpush.msra.mxu0 %v357
    %385 = vmatmul.f32.gmra.mxu0 %v367
    %v386 = vpop.f32.mrf.mxu0
    %v387 = vadd.f32 %v365, %v386
    %388 = vdwg.mxu0
    %v389 = vadd.f32 %v58, %v387
    %v390 = vld [vmem:[%s2 + $0x17] ss:$0 sm:$0xff]
    %v391 = vld [vmem:[%s2 + $0x20] ss:$0 sm:$0xff]
    %v392 = vsel %vm193, %v389, 0.0
    %393 = vadd.xlane.f32.xlu0 %v392
    %v394 = vpop.xlane.xlu0 %393
    %v395 = vmul.f32 %v394, %v203
    %v396 = vsub.f32 %v389, %v395
    %v397 = vmul.f32 %v396, %v396
    %v398 = vsel %vm193, %v397, 0.0
    %399 = vadd.xlane.f32.xlu0 %v398
    %v400 = vpop.xlane.xlu0 %399
    %v401 = vmul.f32 %v400, %v203
    %v402 = vadd.f32 %v401, 1e-05
    %v403 = vrsqrt.pop %v402
    %v404 = vmul.f32 %v403, %v402
    %v405 = vmul.f32 %v404, %v403
    %v406 = vmul.f32 0.5, %v405
    %v407 = vsub.f32 1.5, %v406
    %v408 = vmul.f32 %v403, %v407
    %vm409 = vweird.f32 %v402
    %vm410 = vweird.f32 %v403
    %vm411 = vmor %vm409, %vm410
    %v412 = vsel %vm411, %v403, %v408
    %v413 = vmul.f32 %v396, %v412
    %v414 = vmul.f32 %v413, %v390
    %v415 = vadd.f32 %v414, %v391
    %v416 = vld [vmem:[%s1 + $0x330] sm:$0xff]
    %v417 = vld [vmem:[%s1 + $0x340] sm:$0xff]
    %v418 = vld [vmem:[%s1 + $0x350] sm:$0xff]
    %v419 = vld [vmem:[%s1 + $0x360] sm:$0xff]
    %v420 = vld [vmem:[%s2 + $0x21] ss:$0 sm:$0xff]
    %v422 = vsel %vm120, %v415, 0
    %424 = vmatpush.msra.mxu0 0.0
    %425 = vmatpush.msra.mxu0 0.0
    %426 = vmatpush.msra.mxu0 0.0
    %427 = vmatpush.msra.mxu0 0.0
    %428 = vmatpush.msra.mxu0 0.0
    %429 = vmatpush.msra.mxu0 0.0
    %430 = vmatpush.msra.mxu0 0.0
    %431 = vmatpush.msra.mxu0 0.0
    %432 = vmatpush.msra.mxu0 0.0
    %433 = vmatpush.msra.mxu0 0.0
    %434 = vmatpush.msra.mxu0 0.0
    %435 = vmatpush.msra.mxu0 0.0
    %436 = vmatpush.msra.mxu0 %v419
    %437 = vmatpush.msra.mxu0 %v418
    %438 = vmatpush.msra.mxu0 %v417
    %439 = vmatpush.msra.mxu0 %v416
    %440 = vmatmul.f32.gmra.mxu0 %v422
    %v441 = vpop.f32.mrf.mxu0
    %v442 = vadd.f32 %v420, %v441
    %443 = vdwg.mxu0
    %v444 = vld [vmem:[%s2 + $0x22] ss:$0 sm:$0xff]
    %v445 = vmul.f32 %v442, %v444
    %v446 = vld [vmem:[%s2 + $0x23] ss:$0 sm:$0xff]
    %v447 = vadd.f32 %v445, %v446
    %v448 = vmul.f32 %v447, 0.5
    %v449 = vtanh.pop %v448
    %v450 = vadd.f32 %v449, 1.0
    %v451 = vmul.f32 %v450, 0.5
    %v452 = vmul.f32 %v447, %v451
    %454 = vrot.lane.b32.xlu0 %v189, 64
    %v455 = vpop.permute.xlu0 %454
    %v457 = vadd.f32 %v452, %v455
    %v458 = vld [vmem:[%s1 + $0x370] sm:$0xff]
    %v459 = vld [vmem:[%s1 + $0x380] sm:$0xff]
    %v460 = vld [vmem:[%s1 + $0x390] sm:$0xff]
    %v461 = vld [vmem:[%s1 + $0x3a0] sm:$0xff]
    %v462 = vld [vmem:[%s1 + $0x3b0] sm:$0xff]
    %v463 = vld [vmem:[%s1 + $0x3c0] sm:$0xff]
    %v464 = vld [vmem:[%s1 + $0x3d0] sm:$0xff]
    %v465 = vld [vmem:[%s1 + $0x3e0] sm:$0xff]
    %v466 = vld [vmem:[%s2 + $0x24] ss:$0 sm:$0xff]
    %v468 = vsel %vm272, %v457, 0
    %470 = vmatpush.msra.mxu0 0.0
    %471 = vmatpush.msra.mxu0 0.0
    %472 = vmatpush.msra.mxu0 0.0
    %473 = vmatpush.msra.mxu0 0.0
    %474 = vmatpush.msra.mxu0 0.0
    %475 = vmatpush.msra.mxu0 0.0
    %476 = vmatpush.msra.mxu0 0.0
    %477 = vmatpush.msra.mxu0 0.0
    %478 = vmatpush.msra.mxu0 %v465
    %479 = vmatpush.msra.mxu0 %v464
    %480 = vmatpush.msra.mxu0 %v463
    %481 = vmatpush.msra.mxu0 %v462
    %482 = vmatpush.msra.mxu0 %v461
    %483 = vmatpush.msra.mxu0 %v460
    %484 = vmatpush.msra.mxu0 %v459
    %485 = vmatpush.msra.mxu0 %v458
    %486 = vmatmul.f32.gmra.mxu0 %v468
    %v487 = vpop.f32.mrf.mxu0
    %v488 = vadd.f32 %v466, %v487
    %489 = vdwg.mxu0
    %v490 = vld [vmem:[%s2 + $0x25] ss:$0 sm:$0xff]
    %v491 = vadd.f32 %v488, %v490
    %v492 = vmax.f32 %v491, 0.0
    %v493 = vand.u32 2147483647, %v491
    %v494 = vsub.f32 0.0, %v493
    %v495 = vmul.f32 %v494, 1.442695
    %v496 = vpow.pop %v495
    %v497 = vadd.f32 %v496, 1.0
    %v498 = vlog2.pop %v497
    %v499 = vmul.f32 %v498, 0.6931472
    %v500 = vmul.f32 -0.5, %v496
    %v501 = vadd.f32 %v500, 1.0
    %v502 = vmul.f32 %v501, %v496
    %v503 = vand.u32 2147483647, %v496
    %vm504 = vcmp.lt.f32.partialorder %v503, 0.0004427343
    %v505 = vsel %vm504, %v502, %v499
    %v506 = vadd.f32 %v492, %v505
    %v507 = vsel %vm313, %v506, 0.0
    %508 = vadd.xlane.f32.xlu0 %v507
    %v509 = vpop.xlane.xlu0 %508
    %v510 = vmul.f32 %v509, %v323
    %v511 = vsel %vm313, %v457, 0.0
    %512 = vadd.xlane.f32.xlu0 %v511
    %v513 = vpop.xlane.xlu0 %512
    %v514 = vmul.f32 %v513, %v323
    %v515 = vmul.f32 %v488, %v510
    %v516 = vmul.f32 %v515, %v514
    %518 = vrot.lane.b32.xlu0 %v516, 16
    %v519 = vpop.permute.xlu0 %518
    %v521 = vmul.f32 %v488, %v519
    %523 = vrot.lane.b32.xlu0 %v521, 48
    %v524 = vpop.permute.xlu0 %523
    %v526 = vsel %vm340, %v524, 0.0
    %527 = vadd.xlane.f32.xlu0 %v526
    %v528 = vpop.xlane.xlu0 %527
    %v529 = vld [vmem:[%s2 + $0x26] ss:$0 sm:$0xff]
    %v530 = vmul.f32 %v457, %v529
    %v531 = vadd.f32 %v528, %v530
    %v532 = vmul.f32 %v442, 0.5
    %v533 = vtanh.pop %v532
    %v534 = vadd.f32 %v533, 1.0
    %v535 = vmul.f32 %v534, 0.5
    %v536 = vmul.f32 %v442, %v535
    %538 = vrot.lane.b32.xlu0 %v536, 64
    %v539 = vpop.permute.xlu0 %538
    %v541 = vmul.f32 %v531, %v539
    %v542 = vld [vmem:[%s1 + $0x3f0] sm:$0xff]
    %v543 = vld [vmem:[%s1 + $0x400] sm:$0xff]
    %v544 = vld [vmem:[%s1 + $0x410] sm:$0xff]
    %v545 = vld [vmem:[%s1 + $0x420] sm:$0xff]
    %v546 = vld [vmem:[%s1 + $0x430] sm:$0xff]
    %v547 = vld [vmem:[%s1 + $0x440] sm:$0xff]
    %v548 = vld [vmem:[%s1 + $0x450] sm:$0xff]
    %v549 = vld [vmem:[%s1 + $0x460] sm:$0xff]
    %v550 = vld [vmem:[%s2 + $0x27] ss:$0 sm:$0xff]
    %v552 = vsel %vm272, %v541, 0
    %554 = vmatpush.msra.mxu0 0.0
    %555 = vmatpush.msra.mxu0 0.0
    %556 = vmatpush.msra.mxu0 0.0
    %557 = vmatpush.msra.mxu0 0.0
    %558 = vmatpush.msra.mxu0 0.0
    %559 = vmatpush.msra.mxu0 0.0
    %560 = vmatpush.msra.mxu0 0.0
    %561 = vmatpush.msra.mxu0 0.0
    %562 = vmatpush.msra.mxu0 %v549
    %563 = vmatpush.msra.mxu0 %v548
    %564 = vmatpush.msra.mxu0 %v547
    %565 = vmatpush.msra.mxu0 %v546
    %566 = vmatpush.msra.mxu0 %v545
    %567 = vmatpush.msra.mxu0 %v544
    %568 = vmatpush.msra.mxu0 %v543
    %569 = vmatpush.msra.mxu0 %v542
    %570 = vmatmul.f32.gmra.mxu0 %v552
    %v571 = vpop.f32.mrf.mxu0
    %v572 = vadd.f32 %v550, %v571
    %573 = vdwg.mxu0
    %v574 = vadd.f32 %v389, %v572
    %v575 = vld [vmem:[%s2 + $0x3] ss:$0 sm:$0xff]
    %v576 = vld [vmem:[%s2 + $0x4] ss:$0 sm:$0xff]
    %v577 = vsel %vm193, %v574, 0.0
    %578 = vadd.xlane.f32.xlu0 %v577
    %v579 = vpop.xlane.xlu0 %578
    %v580 = vmul.f32 %v579, %v203
    %v581 = vsub.f32 %v574, %v580
    %v582 = vmul.f32 %v581, %v581
    %v583 = vsel %vm193, %v582, 0.0
    %584 = vadd.xlane.f32.xlu0 %v583
    %v585 = vpop.xlane.xlu0 %584
    %v586 = vmul.f32 %v585, %v203
    %v587 = vadd.f32 %v586, 1e-05
    %v588 = vrsqrt.pop %v587
    %v589 = vmul.f32 %v588, %v587
    %v590 = vmul.f32 %v589, %v588
    %v591 = vmul.f32 0.5, %v590
    %v592 = vsub.f32 1.5, %v591
    %v593 = vmul.f32 %v588, %v592
    %vm594 = vweird.f32 %v587
    %vm595 = vweird.f32 %v588
    %vm596 = vmor %vm594, %vm595
    %v597 = vsel %vm596, %v588, %v593
    %v598 = vmul.f32 %v581, %v597
    %v599 = vmul.f32 %v598, %v575
    %v600 = vadd.f32 %v599, %v576
    %v601 = vld [vmem:[%s1 + $0x470] sm:$0xff]
    %v602 = vld [vmem:[%s1 + $0x480] sm:$0xff]
    %v603 = vld [vmem:[%s1 + $0x490] sm:$0xff]
    %v604 = vld [vmem:[%s1 + $0x4a0] sm:$0xff]
    %v605 = vld [vmem:[%s2 + $0x5] ss:$0 sm:$0xff]
    %v607 = vsel %vm120, %v600, 0
    %609 = vmatpush.msra.mxu0 0.0
    %610 = vmatpush.msra.mxu0 0.0
    %611 = vmatpush.msra.mxu0 0.0
    %612 = vmatpush.msra.mxu0 0.0
    %613 = vmatpush.msra.mxu0 0.0
    %614 = vmatpush.msra.mxu0 0.0
    %615 = vmatpush.msra.mxu0 0.0
    %616 = vmatpush.msra.mxu0 0.0
    %617 = vmatpush.msra.mxu0 0.0
    %618 = vmatpush.msra.mxu0 0.0
    %619 = vmatpush.msra.mxu0 0.0
    %620 = vmatpush.msra.mxu0 0.0
    %621 = vmatpush.msra.mxu0 %v604
    %622 = vmatpush.msra.mxu0 %v603
    %623 = vmatpush.msra.mxu0 %v602
    %624 = vmatpush.msra.mxu0 %v601
    %625 = vmatmul.f32.gmra.mxu0 %v607
    %v626 = vpop.f32.mrf.mxu0
    %v627 = vadd.f32 %v605, %v626
    %628 = vdwg.mxu0
    %629 = vst.msk [vmem:[#allocation2] sm:$0x3] %vm340, %v627
    // Predicated region
    $region14: #{forward.1} parent=1 // pred_check
      _
    $region15: #{forward.1} parent=1 // pred_check_branch
      %631 = sbr.rel (0) target = $region17
    $region16: #{forward.1} parent=1 // pred_region
      %633 = vsyncadd [#allocation3], 0
      %s635 = sshll.u32 [#allocation2], 4
      %s636 = int_to_ptr.vmem [resolvable:$true] %s635
      %s637 = sshll.u32 %s3, 4
      %s638 = int_to_ptr.hbm [resolvable:$true] %s637
      %640 = dma.vmem_to_hbm [thread:$0]  %s636, 32, %s638, [#allocation3]
    $region17: #{forward.1} parent=1 // pred_fallthru
      _
    // Predicated region
    $region18: #{forward.1} parent=1 // pred_check
      _
    $region19: #{forward.1} parent=1 // pred_check_branch
      %642 = sbr.rel (0) target = $region21
    $region20: #{forward.1} parent=1 // pred_region
      %644 = dma.done [#allocation3], 32
    $region21: #{forward.1} parent=1 // pred_fallthru
      _
    %645 = vsyncpa [#allocation3], 1

</llo_original>
